<compile_context>
chip_gen: v5e
topology: v5e:2x2
jax: 0.10.0
libtpu: 0.0.40
codegen_flags: <defaults>
</compile_context>

<pallas_src>
import functools

import jax
import jax.numpy as jnp
from jax.experimental import pallas as pl
from jax.experimental.pallas import tpu as pltpu


def _round_up(x, m):
    return ((x + m - 1) // m) * m


def _multi_nce_kernel(logits_ref, targets_ref, loss_ref):
    # logits_ref / targets_ref: (TB, C) tile in VMEM; loss_ref: (TB, 1).
    # Compute in f32 regardless of input dtype (v5e VPU/EUP have no bf16).
    x = logits_ref[...].astype(jnp.float32)
    t = targets_ref[...].astype(jnp.float32)

    # Log-space form of -log(sum_c softmax(x)_c * t_c):
    #   m     = max_c x
    #   denom = sum_c exp(x - m)
    #   num   = sum_c exp(x - m) * t
    #   loss  = log(denom) - log(num)
    # No divide / reciprocal, one fewer (TB, C) temporary, slightly more
    # numerically robust than dividing first.
    m = jnp.max(x, axis=-1, keepdims=True)
    e = jnp.exp(x - m)
    denom = jnp.sum(e, axis=-1, keepdims=True)
    num = jnp.sum(e * t, axis=-1, keepdims=True)
    loss_ref[...] = jnp.log(denom) - jnp.log(num)


def _choose_block_b(batch, num_classes, in_itemsize):
    """Largest row tile (multiple of 8) whose VMEM working set stays ~24 MiB.

    Working set per grid step ~= 2 inputs * 2 pipeline buffers * TB*C*in_bytes
    plus ~3 f32 (TB, C) temporaries during compute.  24 MiB fits every TPU
    generation (v7x only has 64 MiB physical VMEM).
    """
    target_bytes = 24 * 1024 * 1024
    per_row_bytes = num_classes * (4 * in_itemsize + 3 * 4)
    bb = target_bytes // max(per_row_bytes, 1)
    bb = int(max(8, min(1024, bb)))
    bb = (bb // 8) * 8
    bb = min(bb, _round_up(batch, 8))  # never exceed the (8-rounded) batch
    return max(8, bb)


@functools.partial(jax.jit, static_argnames=("reduction", "block_b"))
def multi_nce_loss(logits, targets, reduction="mean", block_b=None):
    """Pallas-TPU MultiNCELoss: -log((softmax(logits, 1) * targets).sum(1))."""
    assert reduction in ("none", "sum", "mean")
    B, C = logits.shape
    assert targets.shape == (B, C)

    in_itemsize = jnp.dtype(logits.dtype).itemsize
    if block_b is None:
        block_b = _choose_block_b(B, C, in_itemsize)

    # TODO(synk): for very large C (>~64k) add a class-tiled grid axis with
    # online max/denom/num accumulators so block_b can stay large within
    # v7x's 64 MiB VMEM; a single full-C tile is used here.

    # Pad the batch so the grid evenly covers it.  Padded target rows are all
    # ones, so num == denom and the padded loss is exactly 0 (discarded below).
    B_pad = _round_up(B, block_b)
    if B_pad != B:
        pad = B_pad - B
        logits = jnp.pad(logits, ((0, pad), (0, 0)))
        targets = jnp.pad(targets, ((0, pad), (0, 0)), constant_values=1)

    grid = (B_pad // block_b,)

    cost = pl.CostEstimate(
        flops=5 * B_pad * C,
        transcendentals=B_pad * C + 2 * B_pad,
        bytes_accessed=2 * B_pad * C * in_itemsize + B_pad * 4,
    )

    per_row = pl.pallas_call(
        _multi_nce_kernel,
        out_shape=jax.ShapeDtypeStruct((B_pad, 1), jnp.float32),
        grid_spec=pltpu.PrefetchScalarGridSpec(
            num_scalar_prefetch=0,
            grid=grid,
            in_specs=[
                pl.BlockSpec((block_b, C), lambda i: (i, 0)),
                pl.BlockSpec((block_b, C), lambda i: (i, 0)),
            ],
            out_specs=pl.BlockSpec((block_b, 1), lambda i: (i, 0)),
        ),
        compiler_params=pltpu.CompilerParams(
            dimension_semantics=("parallel",),
            vmem_limit_bytes=48 * 1024 * 1024,
        ),
        cost_estimate=cost,
    )(logits, targets)

    loss = per_row[:B, 0]  # (B,), matches torch's .sum(1) result shape
    if reduction == "none":
        return loss
    if reduction == "sum":
        return jnp.sum(loss)
    return jnp.mean(loss)


def _reference(logits, targets, reduction="mean"):
    # pure-JAX reference mirroring the PyTorch module
    p = jax.nn.softmax(logits.astype(jnp.float32), axis=1)
    loss = -jnp.log(jnp.sum(p * targets.astype(jnp.float32), axis=1))
    if reduction == "none":
        return loss
    if reduction == "sum":
        return jnp.sum(loss)
    return jnp.mean(loss)


if __name__ == "__main__":
    key = jax.random.PRNGKey(0)
    k1, k2, k3, k4 = jax.random.split(key, 4)

    ok = True

    # f32 inputs: batch=16, classes/candidates=32
    B, C = 16, 32
    logits = jax.random.normal(k1, (B, C), dtype=jnp.float32)
    raw = jax.random.uniform(k2, (B, C), dtype=jnp.float32)
    targets = raw / jnp.sum(raw, axis=1, keepdims=True)
    for reduction in ("none", "sum", "mean"):
        out = jax.block_until_ready(
            multi_nce_loss(logits, targets, reduction=reduction))
        ref = _reference(logits, targets, reduction=reduction)
        if not jnp.allclose(out, ref, atol=1e-5, rtol=1e-5):
            ok = False
            print(f"MISMATCH f32 reduction={reduction}: {out} vs {ref}")

    # bf16 inputs (kernel upcasts internally) with a ragged batch (padding path).
    B2, C2 = 13, 40
    logits2 = jax.random.normal(k3, (B2, C2), dtype=jnp.float32)
    raw2 = jax.random.uniform(k4, (B2, C2), dtype=jnp.float32)
    targets2 = raw2 / jnp.sum(raw2, axis=1, keepdims=True)
    lb, tb = logits2.astype(jnp.bfloat16), targets2.astype(jnp.bfloat16)
    out = jax.block_until_ready(multi_nce_loss(lb, tb, reduction="mean"))
    ref = _reference(lb, tb, reduction="mean")
    if not jnp.allclose(out, ref, atol=2e-2, rtol=2e-2):
        ok = False
        print(f"MISMATCH bf16 mean: {out} vs {ref}")

    if ok:
        print("KERNEL_OK")
</pallas_src>

<mosaic_0001>
module attributes {stable_mosaic.version = 11 : i64} {
  func.func @_multi_nce_kernel(%arg0: i32, %arg1: memref<16x32xf32, #tpu.memory_space<vmem>>, %arg2: memref<16x32xf32, #tpu.memory_space<vmem>>, %arg3: memref<16x1xf32, #tpu.memory_space<vmem>>) attributes {dimension_semantics = [#tpu.dimension_semantics<parallel>], iteration_bounds = array<i64: 1>, scalar_prefetch = 0 : i64, scratch_operands = 0 : i64, tpu.core_type = #tpu.core_type<tc>, window_params = [{transform_indices = @transform_0, window_bounds = array<i64: 16, 32>}, {transform_indices = @transform_1, window_bounds = array<i64: 16, 32>}, {transform_indices = @transform_2, window_bounds = array<i64: 16, 1>}]} {
    %c0 = arith.constant 0 : index
    %c0_0 = arith.constant 0 : index
    %0 = vector.load %arg1[%c0, %c0_0] : memref<16x32xf32, #tpu.memory_space<vmem>>, vector<16x32xf32>
    %c0_1 = arith.constant 0 : index
    %c0_2 = arith.constant 0 : index
    %1 = vector.load %arg2[%c0_1, %c0_2] : memref<16x32xf32, #tpu.memory_space<vmem>>, vector<16x32xf32>
    %cst = arith.constant dense<0xFF800000> : vector<16xf32>
    %2 = vector.multi_reduction <maximumf>, %0, %cst [1] : vector<16x32xf32> to vector<16xf32>
    %3 = vector.shape_cast %2 : vector<16xf32> to vector<16x1xf32>
    %4 = vector.broadcast %3 : vector<16x1xf32> to vector<16x32xf32>
    %5 = arith.subf %0, %4 : vector<16x32xf32>
    %6 = math.exp %5 : vector<16x32xf32>
    %cst_3 = arith.constant dense<0.000000e+00> : vector<16xf32>
    %7 = vector.multi_reduction <add>, %6, %cst_3 [1] : vector<16x32xf32> to vector<16xf32>
    %8 = vector.shape_cast %7 : vector<16xf32> to vector<16x1xf32>
    %9 = arith.mulf %6, %1 : vector<16x32xf32>
    %cst_4 = arith.constant dense<0.000000e+00> : vector<16xf32>
    %10 = vector.multi_reduction <add>, %9, %cst_4 [1] : vector<16x32xf32> to vector<16xf32>
    %11 = vector.shape_cast %10 : vector<16xf32> to vector<16x1xf32>
    %12 = math.log %8 : vector<16x1xf32>
    %13 = math.log %11 : vector<16x1xf32>
    %14 = arith.subf %12, %13 : vector<16x1xf32>
    %c0_5 = arith.constant 0 : index
    %c0_6 = arith.constant 0 : index
    %15 = vector.load %arg3[%c0_5, %c0_6] : memref<16x1xf32, #tpu.memory_space<vmem>>, vector<16x1xf32>
    tpu.vector_store %arg3[%c0_5, %c0_6], %14 {strides = array<i32>} : memref<16x1xf32, #tpu.memory_space<vmem>>, vector<16x1xf32>,
    return
  }
  func.func @transform_0(%arg0: i32) -> (i32, i32) {
    %c0_i32 = arith.constant 0 : i32
    %c0_i32_0 = arith.constant 0 : i32
    return %arg0, %c0_i32 : i32, i32
  }
  func.func @transform_1(%arg0: i32) -> (i32, i32) {
    %c0_i32 = arith.constant 0 : i32
    %c0_i32_0 = arith.constant 0 : i32
    return %arg0, %c0_i32 : i32, i32
  }
  func.func @transform_2(%arg0: i32) -> (i32, i32) {
    %c0_i32 = arith.constant 0 : i32
    %c0_i32_0 = arith.constant 0 : i32
    return %arg0, %c0_i32 : i32, i32
  }
}

</mosaic_0001>

<llo_original>
// kernel: multi_nce_loss.1
$region0: #{multi_nce_loss.1}
  #allocation0 [shape = 'u32[]', space=smem, size = 0x4, offset = 0x4, fixed_abs, tag = 'smem constant byte address 0x4 - core index']
  #allocation1 [shape = 'u32[72,128]{1,0:T(1,128)}', space=vmem, size = 0x9000, scoped, tag = 'internal scratch']
  %s0 = inlined_call_operand.hbm [shape: f32[16,32], index: 0, kind: input, shape index: {}]
  %s1 = inlined_call_operand.hbm [shape: f32[16,32], index: 1, kind: input, shape index: {}]
  %s2 = inlined_call_operand.vmem [shape: f32[16,1], index: 2, kind: output, shape index: {}]
  %s3 = sld [smem:[#allocation0]]
  $region26: #{multi_nce_loss.1} parent=0
    _
  %s5 = ssub.s32 1, %s3
  %s6 = scalar_select 0, %s5, %s3
  $region1: #{multi_nce_loss.1} parent=0
    #allocation2 [shape = 'u8[8192]{0}', space=vmem, size = 0x2000, scoped, tag = 'input window, operand 0, single buffered']
    #allocation3 [shape = 's32[1]{0}', space=sflag, size = 0x4, scoped, tag = 'scoped memory for multi_nce_loss.1']
    #allocation4 [shape = 'u8[8192]{0}', space=vmem, size = 0x2000, scoped, tag = 'input window, operand 1, single buffered']
    #allocation5 [shape = 's32[1]{0}', space=sflag, size = 0x4, scoped, tag = 'scoped memory for multi_nce_loss.1']
    %7 = vsyncpa [#allocation3], 0
    %8 = vsyncpa [#allocation5], 0
    // Predicated region
    $region2: #{multi_nce_loss.1} parent=1 // pred_check
      _
    $region3: #{multi_nce_loss.1} parent=1 // pred_check_branch
      %10 = sbr.rel (0) target = $region5
    $region4: #{multi_nce_loss.1} parent=1 // pred_region
      %12 = vsyncadd [#allocation3], 0
      %s13 = sshll.u32 %s0, 4
      %s14 = int_to_ptr.hbm [resolvable:$true] %s13
      %s15 = sshll.u32 [#allocation2], 4
      %s16 = int_to_ptr.vmem [resolvable:$true] %s15
      %21 = dma.hbm_to_vmem [thread:$0]  %s14, 256, %s16, [#allocation3], 128, 128, 8
    $region5: #{multi_nce_loss.1} parent=1 // pred_fallthru
      _
    // Predicated region
    $region6: #{multi_nce_loss.1} parent=1 // pred_check
      _
    $region7: #{multi_nce_loss.1} parent=1 // pred_check_branch
      %23 = sbr.rel (0) target = $region9
    $region8: #{multi_nce_loss.1} parent=1 // pred_region
      %25 = vsyncadd [#allocation5], 0
      %s26 = sshll.u32 %s1, 4
      %s27 = int_to_ptr.hbm [resolvable:$true] %s26
      %s28 = sshll.u32 [#allocation4], 4
      %s29 = int_to_ptr.vmem [resolvable:$true] %s28
      %34 = dma.hbm_to_vmem [thread:$0]  %s27, 256, %s29, [#allocation5], 128, 128, 8
    $region9: #{multi_nce_loss.1} parent=1 // pred_fallthru
      _
    // Predicated region
    $region10: #{multi_nce_loss.1} parent=1 // pred_check
      _
    $region11: #{multi_nce_loss.1} parent=1 // pred_check_branch
      %36 = sbr.rel (0) target = $region13
    $region12: #{multi_nce_loss.1} parent=1 // pred_region
      %38 = dma.done [#allocation3], 256
    $region13: #{multi_nce_loss.1} parent=1 // pred_fallthru
      _
    // Predicated region
    $region14: #{multi_nce_loss.1} parent=1 // pred_check
      _
    $region15: #{multi_nce_loss.1} parent=1 // pred_check_branch
      %40 = sbr.rel (0) target = $region17
    $region16: #{multi_nce_loss.1} parent=1 // pred_region
      %42 = dma.done [#allocation5], 256
    $region17: #{multi_nce_loss.1} parent=1 // pred_fallthru
      _
    %v43 = vld [vmem:[#allocation2] sm:$0xff]
    %v44 = vld [vmem:[#allocation2 + $0x8] sm:$0xff]
    %v45 = vld [vmem:[#allocation4] sm:$0xff]
    %v46 = vld [vmem:[#allocation4 + $0x8] sm:$0xff]
    %vm47 = vcmask 261120
    %v48 = vsel %vm47, %v43, -inf
    %49 = vmax.xlane.f32.xlu0 %v48
    %v50 = vpop.xlane.xlu0 %49
    %v51 = vsel %vm47, %v44, -inf
    %52 = vmax.xlane.f32.xlu0 %v51
    %v53 = vpop.xlane.xlu0 %52
    %v54 = vsub.f32 %v43, %v50
    %v55 = vsub.f32 %v44, %v53
    %v56 = vmul.f32 %v54, 1.442695
    %v57 = vpow.pop %v56
    %v58 = vmul.f32 %v55, 1.442695
    %v59 = vpow.pop %v58
    %v60 = vsel %vm47, %v57, 0.0
    %61 = vadd.xlane.f32.xlu0 %v60
    %v62 = vpop.xlane.xlu0 %61
    %v63 = vsel %vm47, %v59, 0.0
    %64 = vadd.xlane.f32.xlu0 %v63
    %v65 = vpop.xlane.xlu0 %64
    %v66 = vmul.f32 %v57, %v45
    %v67 = vmul.f32 %v59, %v46
    %v68 = vsel %vm47, %v66, 0.0
    %69 = vadd.xlane.f32.xlu0 %v68
    %v70 = vpop.xlane.xlu0 %69
    %v71 = vsel %vm47, %v67, 0.0
    %72 = vadd.xlane.f32.xlu0 %v71
    %v73 = vpop.xlane.xlu0 %72
    %v74 = vlog2.pop %v62
    %v75 = vmul.f32 %v74, 0.6931472
    %v76 = vlog2.pop %v65
    %v77 = vmul.f32 %v76, 0.6931472
    %v78 = vlog2.pop %v70
    %v79 = vmul.f32 %v78, 0.6931472
    %v80 = vlog2.pop %v73
    %v81 = vmul.f32 %v80, 0.6931472
    %v82 = vsub.f32 %v75, %v79
    %v83 = vsub.f32 %v77, %v81
    %vm84 = vcmask 7168
    %85 = vst.msk [vmem:[%s2] sm:$0xff] %vm84, %v82
    %86 = vst.msk [vmem:[%s2 + $0x8] sm:$0xff] %vm84, %v83
    // Predicated region
    $region18: #{multi_nce_loss.1} parent=1 // pred_check
      _
    $region19: #{multi_nce_loss.1} parent=1 // pred_check_branch
      %88 = sbr.rel (0) target = $region21
    $region20: #{multi_nce_loss.1} parent=1 // pred_region
      _
    $region21: #{multi_nce_loss.1} parent=1 // pred_fallthru
      _
    // Predicated region
    $region22: #{multi_nce_loss.1} parent=1 // pred_check
      _
    $region23: #{multi_nce_loss.1} parent=1 // pred_check_branch
      %90 = sbr.rel (0) target = $region25
    $region24: #{multi_nce_loss.1} parent=1 // pred_region
      _
    $region25: #{multi_nce_loss.1} parent=1 // pred_fallthru
      _
    %91 = vsyncpa [#allocation3], 1
    %92 = vsyncpa [#allocation5], 1

</llo_original>
